<compile_context>
chip_gen: v7x
topology: tpu7x:2x2x1
jax: 0.10.0
libtpu: 0.0.40
codegen_flags: <defaults>
</compile_context>

<pallas_src>
import functools

import jax
import jax.numpy as jnp
from jax.experimental import pallas as pl
from jax.experimental.pallas import tpu as pltpu

_LANE = 128
_SUBLANE = 8


def _round_up(x, m):
    return ((x + m - 1) // m) * m


def _vmem_capacity_bytes():
    """Per-core VMEM capacity; conservative fallback if query is unavailable."""
    try:
        return int(pltpu.get_tpu_info().vmem_capacity_bytes)
    except Exception:
        return 64 * 1024 * 1024  # v7x per-TC value (smallest current gen)


def _make_fused_mlp_kernel(num_layers):
    """Kernel: (x, w0, b0, ..., w_{L-1}, b_{L-1}, o). All layers in one body."""

    def kernel(x_ref, *args):
        wb_refs = args[: 2 * num_layers]
        o_ref = args[2 * num_layers]

        h = x_ref[...].astype(jnp.float32)
        for l in range(num_layers):
            w = wb_refs[2 * l][...]
            b = wb_refs[2 * l + 1][...]
            # MXU matmul (bf16 operands) with f32 accumulation; bias + ReLU on
            # the VPU in f32.
            h = jnp.dot(h.astype(w.dtype), w, preferred_element_type=jnp.float32)
            h = h + b.astype(jnp.float32)
            if l < num_layers - 1:
                h = jnp.maximum(h, 0.0)
        o_ref[...] = h.astype(o_ref.dtype)

    return kernel


def _const_spec(shape):
    """Grid-invariant operand: single-buffered (default double-buffer wastes VMEM)."""
    try:
        return pl.BlockSpec(shape, lambda i: (0,) * len(shape),
                            pipeline_mode=pl.Buffered(1))
    except TypeError:
        # Older jax without pipeline_mode kwarg: fall back to default buffering.
        return pl.BlockSpec(shape, lambda i: (0,) * len(shape))


def _footprint_bytes(block_m, k_in, params_padded, np_out, x_itemsize):
    """VMEM bytes: pipelined in/out tiles + resident params + live f32 intermediate."""
    inp = 2 * block_m * k_in * x_itemsize           # input tile (double-buffered)
    out = 2 * block_m * np_out * x_itemsize         # output tile (double-buffered)
    wb = sum(int(w.size) * w.dtype.itemsize + int(b.size) * b.dtype.itemsize
             for (w, b) in params_padded)           # single-buffered residents
    max_np = max(int(w.shape[1]) for (w, _) in params_padded)
    h_live = 2 * block_m * max_np * 4               # live h + matmul result (f32)
    return inp + out + wb + h_live


def fcn_forward_fused(params_padded, x, nout, *, block_m_max=512):
    """Fused MLP forward.  x:[M, ninp]; params_padded[i] = (W:[K_i, Np_i], b:[1, Np_i])."""
    M, K = x.shape
    num_layers = len(params_padded)
    assert params_padded[0][0].shape[0] == K
    Np_out = params_padded[-1][0].shape[1]
    assert nout <= Np_out

    # --- Row tiling ---------------------------------------------------------
    block_m = min(block_m_max, _round_up(M, _SUBLANE))
    # Prefer >= 2 grid steps so "parallel" rows shard across both v7x TCs.
    if block_m >= 2 * _SUBLANE and pl.cdiv(M, block_m) < 2:
        block_m = _round_up(pl.cdiv(M, 2), _SUBLANE)

    # --- VMEM budgeting -----------------------------------------------------
    vmem_cap = _vmem_capacity_bytes()
    budget = int(0.70 * vmem_cap)                   # leave Mosaic scratch headroom
    while (block_m > _SUBLANE and
           _footprint_bytes(block_m, K, params_padded, Np_out, x.dtype.itemsize) > budget):
        block_m = max(_SUBLANE, _round_up(block_m // 2, _SUBLANE))
    footprint = _footprint_bytes(block_m, K, params_padded, Np_out, x.dtype.itemsize)
    vmem_limit = min(budget, max(4 * footprint, 32 * 1024 * 1024))

    grid = (pl.cdiv(M, block_m),)

    # --- Specs ---------------------------------------------------------------
    # Input: K is the full array extent (legal even when K % 128 != 0), so no
    # padded copy of x is ever materialized in HBM.
    in_specs = [pl.BlockSpec((block_m, K), lambda i: (i, 0))]
    flat_wb = []
    for (w, b) in params_padded:
        in_specs.append(_const_spec(w.shape))
        in_specs.append(_const_spec(b.shape))
        flat_wb += [w, b]

    # Advisory cost for XLA's scheduler around the custom call.
    flops = 2 * M * sum(int(w.shape[0]) * int(w.shape[1]) for (w, _) in params_padded)
    bytes_accessed = (int(x.size) * x.dtype.itemsize
                      + sum(int(w.size) * w.dtype.itemsize + int(b.size) * b.dtype.itemsize
                            for (w, b) in params_padded)
                      + M * int(Np_out) * x.dtype.itemsize)
    cost = pl.CostEstimate(flops=flops, transcendentals=0,
                           bytes_accessed=bytes_accessed)

    out_p = pl.pallas_call(
        _make_fused_mlp_kernel(num_layers),
        out_shape=jax.ShapeDtypeStruct((M, Np_out), x.dtype),
        grid_spec=pltpu.PrefetchScalarGridSpec(
            num_scalar_prefetch=0,
            grid=grid,
            in_specs=in_specs,
            out_specs=pl.BlockSpec((block_m, Np_out), lambda i: (i, 0)),
        ),
        compiler_params=pltpu.CompilerParams(
            dimension_semantics=("parallel",),   # independent rows -> 2-TC shard on v7x
            vmem_limit_bytes=vmem_limit,
        ),
        cost_estimate=cost,
    )(x, *flat_wb)

    # Lane-dense (128-padded) output in the kernel; slice logical nout here.
    return out_p[:, :nout]


def init_fcn_params(key, ninp, nhid, nout, nlayers, param_dtype=jnp.bfloat16):
    """Mirror FullyConnectedNN.__init__ shapes + xavier_normal_ weight init.

    Returns (params, params_padded):
      params        -- list of (W:[in,out], b:[1,out])   (logical shapes)
      params_padded -- layer-0 keeps its logical in-dim (x is fed unpadded);
                       hidden in-dims and all out-dims zero-padded to 128.
    """
    if nlayers > 1:
        dims = [(ninp, nhid)] + [(nhid, nhid)] * (nlayers - 2) + [(nhid, nout)]
    else:
        dims = [(ninp, nout)]

    params, params_padded = [], []
    for li, (fan_in, fan_out) in enumerate(dims):
        key, wk, bk = jax.random.split(key, 3)
        std = (2.0 / (fan_in + fan_out)) ** 0.5  # xavier_normal_
        # stored already transposed: [in, out]  (PyTorch keeps [out, in])
        w = (std * jax.random.normal(wk, (fan_in, fan_out), dtype=jnp.float32)
             ).astype(param_dtype)
        # PyTorch Linear default bias init: U(-1/sqrt(fan_in), 1/sqrt(fan_in))
        bound = 1.0 / (fan_in ** 0.5)
        b = jax.random.uniform(bk, (1, fan_out), dtype=jnp.float32,
                               minval=-bound, maxval=bound).astype(param_dtype)
        params.append((w, b))

        # Zero-padding is exact: padded weight rows/cols and bias lanes are
        # zero, so padded activation lanes stay zero through ReLU.
        kp = fan_in if li == 0 else _round_up(fan_in, _LANE)
        np_ = _round_up(fan_out, _LANE)
        w_p = jnp.zeros((kp, np_), dtype=param_dtype).at[:fan_in, :fan_out].set(w)
        b_p = jnp.zeros((1, np_), dtype=param_dtype).at[:, :fan_out].set(b)
        params_padded.append((w_p, b_p))

    return params, params_padded


class ERBasePallas:
    """JAX/Pallas counterpart of ERBase_ (holds the FCN parameters)."""

    def __init__(self, fc_ninp, fc_nhid, nout, fc_nlayers, fc_dropout, key,
                 param_dtype=jnp.bfloat16):
        del fc_dropout  # inference: dropout is identity
        self.nout = nout
        self.params, self.params_padded = init_fcn_params(
            key, fc_ninp, fc_nhid, nout, fc_nlayers, param_dtype)
        self._fcn_jit = jax.jit(functools.partial(fcn_forward_fused, nout=nout))

    def fcn(self, inputs):
        return self._fcn_jit(self.params_padded, inputs)


if __name__ == "__main__":
    key = jax.random.PRNGKey(0)
    pkey, xkey = jax.random.split(key)

    # Small, module-consistent shapes.
    batch = 8
    fc_ninp, fc_nhid, nout, fc_nlayers, fc_dropout = 32, 32, 16, 3, 0.0

    model = ERBasePallas(fc_ninp, fc_nhid, nout, fc_nlayers, fc_dropout, pkey)
    x = jax.random.normal(xkey, (batch, fc_ninp), dtype=jnp.float32)

    y = model.fcn(x)
    jax.block_until_ready(y)

    # Pure-JAX reference with the same bf16 weights / bf16 activation casts and
    # f32 accumulation as the kernel (padding is numerically exact).
    ref = x
    nl = len(model.params)
    for l, (w, b) in enumerate(model.params):
        ref = jnp.dot(ref.astype(w.dtype), w, preferred_element_type=jnp.float32)
        ref = ref + b.astype(jnp.float32)
        if l < nl - 1:
            ref = jnp.maximum(ref, 0.0)

    assert y.shape == (batch, nout)
    assert jnp.allclose(y, ref, atol=2e-2, rtol=2e-2), float(jnp.max(jnp.abs(y - ref)))

    print("KERNEL_OK")
</pallas_src>

<mosaic_0001>
module attributes {stable_mosaic.version = 11 : i64} {
  func.func @kernel(%arg0: i32, %arg1: memref<8x32xf32, #tpu.memory_space<vmem>>, %arg2: memref<32x128xbf16, #tpu.memory_space<vmem>>, %arg3: memref<1x128xbf16, #tpu.memory_space<vmem>>, %arg4: memref<128x128xbf16, #tpu.memory_space<vmem>>, %arg5: memref<1x128xbf16, #tpu.memory_space<vmem>>, %arg6: memref<128x128xbf16, #tpu.memory_space<vmem>>, %arg7: memref<1x128xbf16, #tpu.memory_space<vmem>>, %arg8: memref<8x128xf32, #tpu.memory_space<vmem>>) attributes {dimension_semantics = [#tpu.dimension_semantics<parallel>], iteration_bounds = array<i64: 1>, scalar_prefetch = 0 : i64, scratch_operands = 0 : i64, tpu.core_type = #tpu.core_type<tc>, window_params = [{transform_indices = @transform_0, window_bounds = array<i64: 8, 32>}, {pipeline_mode = #tpu.pipeline_mode<synchronous>, transform_indices = @transform_1, window_bounds = array<i64: 32, 128>}, {pipeline_mode = #tpu.pipeline_mode<synchronous>, transform_indices = @transform_2, window_bounds = array<i64: 1, 128>}, {pipeline_mode = #tpu.pipeline_mode<synchronous>, transform_indices = @transform_3, window_bounds = array<i64: 128, 128>}, {pipeline_mode = #tpu.pipeline_mode<synchronous>, transform_indices = @transform_4, window_bounds = array<i64: 1, 128>}, {pipeline_mode = #tpu.pipeline_mode<synchronous>, transform_indices = @transform_5, window_bounds = array<i64: 128, 128>}, {pipeline_mode = #tpu.pipeline_mode<synchronous>, transform_indices = @transform_6, window_bounds = array<i64: 1, 128>}, {transform_indices = @transform_7, window_bounds = array<i64: 8, 128>}]} {
    %c0 = arith.constant 0 : index
    %c0_0 = arith.constant 0 : index
    %0 = vector.load %arg1[%c0, %c0_0] : memref<8x32xf32, #tpu.memory_space<vmem>>, vector<8x32xf32>
    %c0_1 = arith.constant 0 : index
    %c0_2 = arith.constant 0 : index
    %1 = vector.load %arg2[%c0_1, %c0_2] : memref<32x128xbf16, #tpu.memory_space<vmem>>, vector<32x128xbf16>
    %c0_3 = arith.constant 0 : index
    %c0_4 = arith.constant 0 : index
    %2 = vector.load %arg3[%c0_3, %c0_4] : memref<1x128xbf16, #tpu.memory_space<vmem>>, vector<1x128xbf16>
    %3 = arith.truncf %0 : vector<8x32xf32> to vector<8x32xbf16>
    %cst = arith.constant dense<0.000000e+00> : vector<8x128xf32>
    %4 = tpu.matmul %3, %1, %cst {dimension_numbers = #tpu.dot_dimension_numbers<[1], [0], [0], [1], [0, 0, 1, 1], [], []>} : vector<8x32xbf16>, vector<32x128xbf16>, vector<8x128xf32> -> vector<8x128xf32>
    %5 = arith.extf %2 : vector<1x128xbf16> to vector<1x128xf32>
    %6 = vector.broadcast %5 : vector<1x128xf32> to vector<8x128xf32>
    %7 = arith.addf %4, %6 : vector<8x128xf32>
    %cst_5 = arith.constant 0.000000e+00 : f32
    %8 = vector.broadcast %cst_5 : f32 to vector<8x128xf32>
    %9 = arith.maximumf %7, %8 : vector<8x128xf32>
    %c0_6 = arith.constant 0 : index
    %c0_7 = arith.constant 0 : index
    %10 = vector.load %arg4[%c0_6, %c0_7] : memref<128x128xbf16, #tpu.memory_space<vmem>>, vector<128x128xbf16>
    %c0_8 = arith.constant 0 : index
    %c0_9 = arith.constant 0 : index
    %11 = vector.load %arg5[%c0_8, %c0_9] : memref<1x128xbf16, #tpu.memory_space<vmem>>, vector<1x128xbf16>
    %12 = arith.truncf %9 : vector<8x128xf32> to vector<8x128xbf16>
    %cst_10 = arith.constant dense<0.000000e+00> : vector<8x128xf32>
    %13 = tpu.matmul %12, %10, %cst_10 {dimension_numbers = #tpu.dot_dimension_numbers<[1], [0], [0], [1], [0, 0, 1, 1], [], []>} : vector<8x128xbf16>, vector<128x128xbf16>, vector<8x128xf32> -> vector<8x128xf32>
    %14 = arith.extf %11 : vector<1x128xbf16> to vector<1x128xf32>
    %15 = vector.broadcast %14 : vector<1x128xf32> to vector<8x128xf32>
    %16 = arith.addf %13, %15 : vector<8x128xf32>
    %cst_11 = arith.constant 0.000000e+00 : f32
    %17 = vector.broadcast %cst_11 : f32 to vector<8x128xf32>
    %18 = arith.maximumf %16, %17 : vector<8x128xf32>
    %c0_12 = arith.constant 0 : index
    %c0_13 = arith.constant 0 : index
    %19 = vector.load %arg6[%c0_12, %c0_13] : memref<128x128xbf16, #tpu.memory_space<vmem>>, vector<128x128xbf16>
    %c0_14 = arith.constant 0 : index
    %c0_15 = arith.constant 0 : index
    %20 = vector.load %arg7[%c0_14, %c0_15] : memref<1x128xbf16, #tpu.memory_space<vmem>>, vector<1x128xbf16>
    %21 = arith.truncf %18 : vector<8x128xf32> to vector<8x128xbf16>
    %cst_16 = arith.constant dense<0.000000e+00> : vector<8x128xf32>
    %22 = tpu.matmul %21, %19, %cst_16 {dimension_numbers = #tpu.dot_dimension_numbers<[1], [0], [0], [1], [0, 0, 1, 1], [], []>} : vector<8x128xbf16>, vector<128x128xbf16>, vector<8x128xf32> -> vector<8x128xf32>
    %23 = arith.extf %20 : vector<1x128xbf16> to vector<1x128xf32>
    %24 = vector.broadcast %23 : vector<1x128xf32> to vector<8x128xf32>
    %25 = arith.addf %22, %24 : vector<8x128xf32>
    %c0_17 = arith.constant 0 : index
    %c0_18 = arith.constant 0 : index
    %26 = vector.load %arg8[%c0_17, %c0_18] : memref<8x128xf32, #tpu.memory_space<vmem>>, vector<8x128xf32>
    tpu.vector_store %arg8[%c0_17, %c0_18], %25 {strides = array<i32>} : memref<8x128xf32, #tpu.memory_space<vmem>>, vector<8x128xf32>,
    return
  }
  func.func @transform_0(%arg0: i32) -> (i32, i32) {
    %c0_i32 = arith.constant 0 : i32
    %c0_i32_0 = arith.constant 0 : i32
    return %arg0, %c0_i32 : i32, i32
  }
  func.func @transform_1(%arg0: i32) -> (i32, i32) {
    %c0_i32 = arith.constant 0 : i32
    %c0_i32_0 = arith.constant 0 : i32
    %c0_i32_1 = arith.constant 0 : i32
    return %c0_i32, %c0_i32_0 : i32, i32
  }
  func.func @transform_2(%arg0: i32) -> (i32, i32) {
    %c0_i32 = arith.constant 0 : i32
    %c0_i32_0 = arith.constant 0 : i32
    %c0_i32_1 = arith.constant 0 : i32
    return %c0_i32, %c0_i32_0 : i32, i32
  }
  func.func @transform_3(%arg0: i32) -> (i32, i32) {
    %c0_i32 = arith.constant 0 : i32
    %c0_i32_0 = arith.constant 0 : i32
    %c0_i32_1 = arith.constant 0 : i32
    return %c0_i32, %c0_i32_0 : i32, i32
  }
  func.func @transform_4(%arg0: i32) -> (i32, i32) {
    %c0_i32 = arith.constant 0 : i32
    %c0_i32_0 = arith.constant 0 : i32
    %c0_i32_1 = arith.constant 0 : i32
    return %c0_i32, %c0_i32_0 : i32, i32
  }
  func.func @transform_5(%arg0: i32) -> (i32, i32) {
    %c0_i32 = arith.constant 0 : i32
    %c0_i32_0 = arith.constant 0 : i32
    %c0_i32_1 = arith.constant 0 : i32
    return %c0_i32, %c0_i32_0 : i32, i32
  }
  func.func @transform_6(%arg0: i32) -> (i32, i32) {
    %c0_i32 = arith.constant 0 : i32
    %c0_i32_0 = arith.constant 0 : i32
    %c0_i32_1 = arith.constant 0 : i32
    return %c0_i32, %c0_i32_0 : i32, i32
  }
  func.func @transform_7(%arg0: i32) -> (i32, i32) {
    %c0_i32 = arith.constant 0 : i32
    %c0_i32_0 = arith.constant 0 : i32
    return %arg0, %c0_i32 : i32, i32
  }
}

</mosaic_0001>

<llo_original>
// kernel: fcn_forward_fused.1
$region0: #{fcn_forward_fused.1}
  #allocation0 [shape = 'u32[]', space=smem, size = 0x4, offset = 0x4, fixed_abs, tag = 'smem constant byte address 0x4 - core index']
  #allocation1 [shape = 'u32[144,128]{1,0:T(1,128)}', space=vmem, size = 0x12000, scoped, tag = 'internal scratch']
  %s0 = inlined_call_operand.vmem [shape: f32[8,32], index: 0, kind: input, shape index: {}]
  %s1 = inlined_call_operand.hbm [shape: bf16[32,128], index: 1, kind: input, shape index: {}]
  %s2 = inlined_call_operand.vmem [shape: bf16[1,128], index: 2, kind: input, shape index: {}]
  %s3 = inlined_call_operand.hbm [shape: bf16[128,128], index: 3, kind: input, shape index: {}]
  %s4 = inlined_call_operand.vmem [shape: bf16[1,128], index: 4, kind: input, shape index: {}]
  %s5 = inlined_call_operand.hbm [shape: bf16[128,128], index: 5, kind: input, shape index: {}]
  %s6 = inlined_call_operand.vmem [shape: bf16[1,128], index: 6, kind: input, shape index: {}]
  %s7 = inlined_call_operand.hbm [shape: f32[8,128], index: 7, kind: output, shape index: {}]
  %s8 = sld [smem:[#allocation0]]
  $region50: #{fcn_forward_fused.1} parent=0
    _
  %s10 = ssub.s32 1, %s8
  %s11 = scalar_select 0, %s10, %s8
  $region1: #{fcn_forward_fused.1} parent=0
    #allocation2 [shape = 'u8[8192]{0}', space=vmem, size = 0x2000, scoped, tag = 'input window, operand 1, single buffered']
    #allocation3 [shape = 's32[1]{0}', space=sflag, size = 0x4, scoped, tag = 'scoped memory for fcn_forward_fused.1']
    #allocation4 [shape = 's32[1]{0}', space=sflag, size = 0x4, scoped, tag = 'scoped memory for fcn_forward_fused.1']
    #allocation5 [shape = 'u8[32768]{0}', space=vmem, size = 0x8000, scoped, tag = 'input window, operand 3, single buffered']
    #allocation6 [shape = 's32[1]{0}', space=sflag, size = 0x4, scoped, tag = 'scoped memory for fcn_forward_fused.1']
    #allocation7 [shape = 'u8[32768]{0}', space=vmem, size = 0x8000, scoped, tag = 'input window, operand 5, single buffered']
    #allocation8 [shape = 'u8[4096]{0}', space=vmem, size = 0x1000, scoped, tag = 'output window, operand 0, single buffered']
    %12 = vsyncpa [#allocation3], 0
    %13 = vsyncpa [#allocation6], 0
    %14 = vsyncpa [#allocation4], 0
    // Predicated region
    $region2: #{fcn_forward_fused.1} parent=1 // pred_check
      _
    $region3: #{fcn_forward_fused.1} parent=1 // pred_check_branch
      %16 = sbr.rel (0) target = $region5
    $region4: #{fcn_forward_fused.1} parent=1 // pred_region
      _
    $region5: #{fcn_forward_fused.1} parent=1 // pred_fallthru
      _
    // Predicated region
    $region6: #{fcn_forward_fused.1} parent=1 // pred_check
      _
    $region7: #{fcn_forward_fused.1} parent=1 // pred_check_branch
      %18 = sbr.rel (0) target = $region9
    $region8: #{fcn_forward_fused.1} parent=1 // pred_region
      %s20 = ssub.s32 256, 256
      %21 = vsyncadd [#allocation3], %s20
      %s22 = sshll.u32 [#allocation2], 4
      %s23 = int_to_ptr.vmem [resolvable:$true] %s22
      %28 = dma.hbm_to_vmem [thread:$0]  %s1, 256, %s23, [#allocation3], 64, 64, 4
    $region9: #{fcn_forward_fused.1} parent=1 // pred_fallthru
      _
    // Predicated region
    $region10: #{fcn_forward_fused.1} parent=1 // pred_check
      _
    $region11: #{fcn_forward_fused.1} parent=1 // pred_check_branch
      %30 = sbr.rel (0) target = $region13
    $region12: #{fcn_forward_fused.1} parent=1 // pred_region
      _
    $region13: #{fcn_forward_fused.1} parent=1 // pred_fallthru
      _
    // Predicated region
    $region14: #{fcn_forward_fused.1} parent=1 // pred_check
      _
    $region15: #{fcn_forward_fused.1} parent=1 // pred_check_branch
      %32 = sbr.rel (0) target = $region17
    $region16: #{fcn_forward_fused.1} parent=1 // pred_region
      %s34 = ssub.s32 1024, 1024
      %35 = vsyncadd [#allocation6], %s34
      %s36 = sshll.u32 [#allocation5], 4
      %s37 = int_to_ptr.vmem [resolvable:$true] %s36
      %42 = dma.hbm_to_vmem [thread:$0]  %s3, 1024, %s37, [#allocation6], 64, 64, 4
    $region17: #{fcn_forward_fused.1} parent=1 // pred_fallthru
      _
    // Predicated region
    $region18: #{fcn_forward_fused.1} parent=1 // pred_check
      _
    $region19: #{fcn_forward_fused.1} parent=1 // pred_check_branch
      %44 = sbr.rel (0) target = $region21
    $region20: #{fcn_forward_fused.1} parent=1 // pred_region
      _
    $region21: #{fcn_forward_fused.1} parent=1 // pred_fallthru
      _
    // Predicated region
    $region22: #{fcn_forward_fused.1} parent=1 // pred_check
      _
    $region23: #{fcn_forward_fused.1} parent=1 // pred_check_branch
      %46 = sbr.rel (0) target = $region25
    $region24: #{fcn_forward_fused.1} parent=1 // pred_region
      %s48 = ssub.s32 1024, 1024
      %49 = vsyncadd [#allocation6], %s48
      %s50 = sshll.u32 [#allocation7], 4
      %s51 = int_to_ptr.vmem [resolvable:$true] %s50
      %56 = dma.hbm_to_vmem [thread:$0]  %s5, 1024, %s51, [#allocation6], 64, 64, 4
    $region25: #{fcn_forward_fused.1} parent=1 // pred_fallthru
      _
    // Predicated region
    $region26: #{fcn_forward_fused.1} parent=1 // pred_check
      _
    $region27: #{fcn_forward_fused.1} parent=1 // pred_check_branch
      %58 = sbr.rel (0) target = $region29
    $region28: #{fcn_forward_fused.1} parent=1 // pred_region
      _
    $region29: #{fcn_forward_fused.1} parent=1 // pred_fallthru
      _
    // Predicated region
    $region30: #{fcn_forward_fused.1} parent=1 // pred_check
      _
    $region31: #{fcn_forward_fused.1} parent=1 // pred_check_branch
      %60 = sbr.rel (0) target = $region33
    $region32: #{fcn_forward_fused.1} parent=1 // pred_region
      %61 = dma.done [#allocation3], 256
    $region33: #{fcn_forward_fused.1} parent=1 // pred_fallthru
      _
    // Predicated region
    $region34: #{fcn_forward_fused.1} parent=1 // pred_check
      _
    $region35: #{fcn_forward_fused.1} parent=1 // pred_check_branch
      %63 = sbr.rel (0) target = $region37
    $region36: #{fcn_forward_fused.1} parent=1 // pred_region
      %64 = dma.done [#allocation6], 1024
    $region37: #{fcn_forward_fused.1} parent=1 // pred_fallthru
      _
    // Predicated region
    $region38: #{fcn_forward_fused.1} parent=1 // pred_check
      _
    $region39: #{fcn_forward_fused.1} parent=1 // pred_check_branch
      %66 = sbr.rel (0) target = $region41
    $region40: #{fcn_forward_fused.1} parent=1 // pred_region
      %67 = dma.done [#allocation6], 1024
    $region41: #{fcn_forward_fused.1} parent=1 // pred_fallthru
      _
    %v69 = vld [vmem:[%s0] sm:$0xff]
    %v70 = vld [vmem:[#allocation2] sm:$0xf]
    %v71 = vld [vmem:[#allocation2 + $0x4] sm:$0xf]
    %v72 = vld [vmem:[#allocation2 + $0x8] sm:$0xf]
    %v73 = vld [vmem:[#allocation2 + $0xc] sm:$0xf]
    %v74 = vld [vmem:[%s2] sm:$0x1]
    %v75 = vpack.c.bf16 %v69, %v69
    %v76 = vunpack.c.l.bf16 %v74
    %v77 = vlaneseq
    %v78 = vshrl.u32 %v77, 7
    %v79 = vsub.s32 0, %v78
    %v80 = vrot.slane %v76, %v79
    %v85 = vunpack.c.l.b16 %v70
    %v86 = vunpack.c.l.b16 %v71
    %v87 = vunpack.c.l.b16 %v72
    %v88 = vunpack.c.l.b16 %v73
    %v89 = vpack.c.b16 %v86, %v85
    %v90 = vpack.c.b16 %v88, %v87
    %vm93 = vcmask 261120
    %v95 = vsel %vm93, %v75, 0
    %97 = vmatprep.subr.bf16.mxu0 0
    %98 = vmatpush1.bf16.msra.mxu0 %v89
    %99 = vmatprep.subr.bf16.mxu0 0
    %100 = vmatpush1.bf16.msra.mxu0 %v90
    %101 = vmatprep.subr.bf16.mxu0 0
    %102 = vmatpush1.bf16.msra.mxu0 0
    %103 = vmatprep.subr.bf16.mxu0 0
    %104 = vmatpush1.bf16.msra.mxu0 0
    %105 = vmatprep.subr.bf16.mxu0 0
    %106 = vmatpush1.bf16.msra.mxu0 0
    %107 = vmatprep.subr.bf16.mxu0 0
    %108 = vmatpush1.bf16.msra.mxu0 0
    %109 = vmatprep.subr.bf16.mxu0 0
    %110 = vmatpush1.bf16.msra.mxu0 0
    %111 = vmatprep.subr.bf16.mxu0 0
    %112 = vmatpush1.bf16.msra.mxu0 0
    %113 = vmatprep.subr.bf16.mxu0 0
    %114 = vmatpush1.bf16.msra.mxu0 0
    %115 = vmatprep.subr.bf16.mxu0 0
    %116 = vmatpush1.bf16.msra.mxu0 0
    %117 = vmatprep.subr.bf16.mxu0 0
    %118 = vmatpush1.bf16.msra.mxu0 0
    %119 = vmatprep.subr.bf16.mxu0 0
    %120 = vmatpush1.bf16.msra.mxu0 0
    %121 = vmatprep.subr.bf16.mxu0 0
    %122 = vmatpush1.bf16.msra.mxu0 0
    %123 = vmatprep.subr.bf16.mxu0 0
    %124 = vmatpush1.bf16.msra.mxu0 0
    %125 = vmatprep.subr.bf16.mxu0 0
    %126 = vmatpush1.bf16.msra.mxu0 0
    %127 = vmatprep.subr.bf16.mxu0 0
    %128 = vmatpush1.bf16.msra.mxu0 0
    %129 = vmatprep.mubr.bf16.mxu0 0
    %130 = vmatmul.mubr.bf16.gmra.mrb[0].mxu0 %v95
    %v131 = vpop.f32.mrb[0].mxu0
    %v132 = vadd.f32 %v80, %v131
    %v133 = vpop.f32.mrb[0].mxu0
    %v134 = vpop.f32.mrb[0].mxu0
    %v135 = vpop.f32.mrb[0].mxu0
    %136 = vdwg.mxu0
    %v137 = vmax.f32 %v132, 0.0
    %v138 = vld [vmem:[#allocation5] sm:$0xf]
    %v139 = vld [vmem:[#allocation5 + $0x4] sm:$0xf]
    %v140 = vld [vmem:[#allocation5 + $0x8] sm:$0xf]
    %v141 = vld [vmem:[#allocation5 + $0xc] sm:$0xf]
    %v142 = vld [vmem:[#allocation5 + $0x10] sm:$0xf]
    %v143 = vld [vmem:[#allocation5 + $0x14] sm:$0xf]
    %v144 = vld [vmem:[#allocation5 + $0x18] sm:$0xf]
    %v145 = vld [vmem:[#allocation5 + $0x1c] sm:$0xf]
    %v146 = vld [vmem:[#allocation5 + $0x20] sm:$0xf]
    %v147 = vld [vmem:[#allocation5 + $0x24] sm:$0xf]
    %v148 = vld [vmem:[#allocation5 + $0x28] sm:$0xf]
    %v149 = vld [vmem:[#allocation5 + $0x2c] sm:$0xf]
    %v150 = vld [vmem:[#allocation5 + $0x30] sm:$0xf]
    %v151 = vld [vmem:[#allocation5 + $0x34] sm:$0xf]
    %v152 = vld [vmem:[#allocation5 + $0x38] sm:$0xf]
    %v153 = vld [vmem:[#allocation5 + $0x3c] sm:$0xf]
    %v154 = vld [vmem:[%s4] sm:$0x1]
    %v155 = vpack.c.bf16 %v137, %v137
    %v156 = vunpack.c.l.bf16 %v154
    %v157 = vlaneseq
    %v158 = vshrl.u32 %v157, 7
    %v159 = vsub.s32 0, %v158
    %v160 = vrot.slane %v156, %v159
    %v177 = vunpack.c.l.b16 %v138
    %v178 = vunpack.c.l.b16 %v139
    %v179 = vunpack.c.l.b16 %v140
    %v180 = vunpack.c.l.b16 %v141
    %v181 = vunpack.c.l.b16 %v142
    %v182 = vunpack.c.l.b16 %v143
    %v183 = vunpack.c.l.b16 %v144
    %v184 = vunpack.c.l.b16 %v145
    %v185 = vunpack.c.l.b16 %v146
    %v186 = vunpack.c.l.b16 %v147
    %v187 = vunpack.c.l.b16 %v148
    %v188 = vunpack.c.l.b16 %v149
    %v189 = vunpack.c.l.b16 %v150
    %v190 = vunpack.c.l.b16 %v151
    %v191 = vunpack.c.l.b16 %v152
    %v192 = vunpack.c.l.b16 %v153
    %v193 = vpack.c.b16 %v178, %v177
    %v194 = vpack.c.b16 %v180, %v179
    %v195 = vpack.c.b16 %v182, %v181
    %v196 = vpack.c.b16 %v184, %v183
    %v197 = vpack.c.b16 %v186, %v185
    %v198 = vpack.c.b16 %v188, %v187
    %v199 = vpack.c.b16 %v190, %v189
    %v200 = vpack.c.b16 %v192, %v191
    %209 = vmatprep.subr.bf16.mxu0 0
    %210 = vmatpush1.bf16.msra.mxu0 %v193
    %211 = vmatprep.subr.bf16.mxu0 0
    %212 = vmatpush1.bf16.msra.mxu0 %v194
    %213 = vmatprep.subr.bf16.mxu0 0
    %214 = vmatpush1.bf16.msra.mxu0 %v195
    %215 = vmatprep.subr.bf16.mxu0 0
    %216 = vmatpush1.bf16.msra.mxu0 %v196
    %217 = vmatprep.subr.bf16.mxu0 0
    %218 = vmatpush1.bf16.msra.mxu0 %v197
    %219 = vmatprep.subr.bf16.mxu0 0
    %220 = vmatpush1.bf16.msra.mxu0 %v198
    %221 = vmatprep.subr.bf16.mxu0 0
    %222 = vmatpush1.bf16.msra.mxu0 %v199
    %223 = vmatprep.subr.bf16.mxu0 0
    %224 = vmatpush1.bf16.msra.mxu0 %v200
    %225 = vmatprep.subr.bf16.mxu0 0
    %226 = vmatpush1.bf16.msra.mxu0 0
    %227 = vmatprep.subr.bf16.mxu0 0
    %228 = vmatpush1.bf16.msra.mxu0 0
    %229 = vmatprep.subr.bf16.mxu0 0
    %230 = vmatpush1.bf16.msra.mxu0 0
    %231 = vmatprep.subr.bf16.mxu0 0
    %232 = vmatpush1.bf16.msra.mxu0 0
    %233 = vmatprep.subr.bf16.mxu0 0
    %234 = vmatpush1.bf16.msra.mxu0 0
    %235 = vmatprep.subr.bf16.mxu0 0
    %236 = vmatpush1.bf16.msra.mxu0 0
    %237 = vmatprep.subr.bf16.mxu0 0
    %238 = vmatpush1.bf16.msra.mxu0 0
    %239 = vmatprep.subr.bf16.mxu0 0
    %240 = vmatpush1.bf16.msra.mxu0 0
    %241 = vmatprep.mubr.bf16.mxu0 0
    %242 = vmatmul.mubr.bf16.gmra.mrb[0].mxu0 %v155
    %v243 = vpop.f32.mrb[0].mxu0
    %v244 = vadd.f32 %v160, %v243
    %v245 = vpop.f32.mrb[0].mxu0
    %v246 = vpop.f32.mrb[0].mxu0
    %v247 = vpop.f32.mrb[0].mxu0
    %248 = vdwg.mxu0
    %v249 = vmax.f32 %v244, 0.0
    %v250 = vld [vmem:[#allocation7] sm:$0xf]
    %v251 = vld [vmem:[#allocation7 + $0x4] sm:$0xf]
    %v252 = vld [vmem:[#allocation7 + $0x8] sm:$0xf]
    %v253 = vld [vmem:[#allocation7 + $0xc] sm:$0xf]
    %v254 = vld [vmem:[#allocation7 + $0x10] sm:$0xf]
    %v255 = vld [vmem:[#allocation7 + $0x14] sm:$0xf]
    %v256 = vld [vmem:[#allocation7 + $0x18] sm:$0xf]
    %v257 = vld [vmem:[#allocation7 + $0x1c] sm:$0xf]
    %v258 = vld [vmem:[#allocation7 + $0x20] sm:$0xf]
    %v259 = vld [vmem:[#allocation7 + $0x24] sm:$0xf]
    %v260 = vld [vmem:[#allocation7 + $0x28] sm:$0xf]
    %v261 = vld [vmem:[#allocation7 + $0x2c] sm:$0xf]
    %v262 = vld [vmem:[#allocation7 + $0x30] sm:$0xf]
    %v263 = vld [vmem:[#allocation7 + $0x34] sm:$0xf]
    %v264 = vld [vmem:[#allocation7 + $0x38] sm:$0xf]
    %v265 = vld [vmem:[#allocation7 + $0x3c] sm:$0xf]
    %v266 = vld [vmem:[%s6] sm:$0x1]
    %v267 = vpack.c.bf16 %v249, %v249
    %v268 = vunpack.c.l.bf16 %v266
    %v269 = vlaneseq
    %v270 = vshrl.u32 %v269, 7
    %v271 = vsub.s32 0, %v270
    %v272 = vrot.slane %v268, %v271
    %v289 = vunpack.c.l.b16 %v250
    %v290 = vunpack.c.l.b16 %v251
    %v291 = vunpack.c.l.b16 %v252
    %v292 = vunpack.c.l.b16 %v253
    %v293 = vunpack.c.l.b16 %v254
    %v294 = vunpack.c.l.b16 %v255
    %v295 = vunpack.c.l.b16 %v256
    %v296 = vunpack.c.l.b16 %v257
    %v297 = vunpack.c.l.b16 %v258
    %v298 = vunpack.c.l.b16 %v259
    %v299 = vunpack.c.l.b16 %v260
    %v300 = vunpack.c.l.b16 %v261
    %v301 = vunpack.c.l.b16 %v262
    %v302 = vunpack.c.l.b16 %v263
    %v303 = vunpack.c.l.b16 %v264
    %v304 = vunpack.c.l.b16 %v265
    %v305 = vpack.c.b16 %v290, %v289
    %v306 = vpack.c.b16 %v292, %v291
    %v307 = vpack.c.b16 %v294, %v293
    %v308 = vpack.c.b16 %v296, %v295
    %v309 = vpack.c.b16 %v298, %v297
    %v310 = vpack.c.b16 %v300, %v299
    %v311 = vpack.c.b16 %v302, %v301
    %v312 = vpack.c.b16 %v304, %v303
    %321 = vmatprep.subr.bf16.mxu0 0
    %322 = vmatpush1.bf16.msra.mxu0 %v305
    %323 = vmatprep.subr.bf16.mxu0 0
    %324 = vmatpush1.bf16.msra.mxu0 %v306
    %325 = vmatprep.subr.bf16.mxu0 0
    %326 = vmatpush1.bf16.msra.mxu0 %v307
    %327 = vmatprep.subr.bf16.mxu0 0
    %328 = vmatpush1.bf16.msra.mxu0 %v308
    %329 = vmatprep.subr.bf16.mxu0 0
    %330 = vmatpush1.bf16.msra.mxu0 %v309
    %331 = vmatprep.subr.bf16.mxu0 0
    %332 = vmatpush1.bf16.msra.mxu0 %v310
    %333 = vmatprep.subr.bf16.mxu0 0
    %334 = vmatpush1.bf16.msra.mxu0 %v311
    %335 = vmatprep.subr.bf16.mxu0 0
    %336 = vmatpush1.bf16.msra.mxu0 %v312
    %337 = vmatprep.subr.bf16.mxu0 0
    %338 = vmatpush1.bf16.msra.mxu0 0
    %339 = vmatprep.subr.bf16.mxu0 0
    %340 = vmatpush1.bf16.msra.mxu0 0
    %341 = vmatprep.subr.bf16.mxu0 0
    %342 = vmatpush1.bf16.msra.mxu0 0
    %343 = vmatprep.subr.bf16.mxu0 0
    %344 = vmatpush1.bf16.msra.mxu0 0
    %345 = vmatprep.subr.bf16.mxu0 0
    %346 = vmatpush1.bf16.msra.mxu0 0
    %347 = vmatprep.subr.bf16.mxu0 0
    %348 = vmatpush1.bf16.msra.mxu0 0
    %349 = vmatprep.subr.bf16.mxu0 0
    %350 = vmatpush1.bf16.msra.mxu0 0
    %351 = vmatprep.subr.bf16.mxu0 0
    %352 = vmatpush1.bf16.msra.mxu0 0
    %353 = vmatprep.mubr.bf16.mxu0 0
    %354 = vmatmul.mubr.bf16.gmra.mrb[0].mxu0 %v267
    %v355 = vpop.f32.mrb[0].mxu0
    %v356 = vadd.f32 %v272, %v355
    %v357 = vpop.f32.mrb[0].mxu0
    %v358 = vpop.f32.mrb[0].mxu0
    %v359 = vpop.f32.mrb[0].mxu0
    %360 = vdwg.mxu0
    %361 = vst [vmem:[#allocation8] sm:$0xff] %v356
    // Predicated region
    $region42: #{fcn_forward_fused.1} parent=1 // pred_check
      _
    $region43: #{fcn_forward_fused.1} parent=1 // pred_check_branch
      %363 = sbr.rel (0) target = $region45
    $region44: #{fcn_forward_fused.1} parent=1 // pred_region
      %s365 = ssub.s32 128, 128
      %366 = vsyncadd [#allocation4], %s365
      %s368 = sshll.u32 [#allocation8], 4
      %s369 = int_to_ptr.vmem [resolvable:$true] %s368
      %371 = dma.vmem_to_hbm [thread:$0]  %s369, 128, %s7, [#allocation4]
    $region45: #{fcn_forward_fused.1} parent=1 // pred_fallthru
      _
    // Predicated region
    $region46: #{fcn_forward_fused.1} parent=1 // pred_check
      _
    $region47: #{fcn_forward_fused.1} parent=1 // pred_check_branch
      %373 = sbr.rel (0) target = $region49
    $region48: #{fcn_forward_fused.1} parent=1 // pred_region
      %374 = dma.done [#allocation4], 128
    $region49: #{fcn_forward_fused.1} parent=1 // pred_fallthru
      _
    %375 = vsyncpa [#allocation3], 1
    %376 = vsyncpa [#allocation6], 1
    %377 = vsyncpa [#allocation4], 1

</llo_original>
